<compile_context>
chip_gen: v7x
topology: tpu7x:2x2x1
jax: 0.10.0
libtpu: 0.0.40
codegen_flags: <defaults>
</compile_context>

<pallas_src>
import functools

import jax
import jax.numpy as jnp
from jax.experimental import pallas as pl
from jax.experimental.pallas import tpu as pltpu


# ------------------------------ shared epilogue ------------------------------ #

def _normalize(a, out_dtype):
    """a: (..., S) positive weights -> a / (sum_S a + 1e-7)."""
    denom = jnp.sum(a, axis=-1, keepdims=True) + 1e-7
    inv = pl.reciprocal(denom, approx=True)        # EUP slot
    inv = inv * (2.0 - denom * inv)                # one Newton step -> full f32 accuracy
    return (a * inv).astype(out_dtype)


# -------------------- path A: batch-tiled, full (S, F) per block ------------- #

def _batch_compute(x_ref, w_ref, b_ref, mask_ref, out_ref):
    # x (1,TB,S,F) native dtype, w (1,F) f32, b (1,S) f32, mask (1,TB,S), out (1,TB,S)
    x = x_ref[0].astype(jnp.float32)                          # (TB, S, F)
    w = w_ref[...].astype(jnp.float32)                        # (1, F)
    b = b_ref[...].astype(jnp.float32)                        # (1, S)
    eij = jnp.sum(x * w[None, :, :], axis=-1) + b             # VPU mul + lane reduce
    a = jnp.exp(jnp.tanh(eij))                                # EUP
    if mask_ref is not None:
        a = a * mask_ref[0].astype(jnp.float32)
    out_ref[0] = _normalize(a, out_ref.dtype)


def _batch_kernel_mask(x_ref, w_ref, b_ref, mask_ref, out_ref):
    _batch_compute(x_ref, w_ref, b_ref, mask_ref, out_ref)


def _batch_kernel_nomask(x_ref, w_ref, b_ref, out_ref):
    _batch_compute(x_ref, w_ref, b_ref, None, out_ref)


# ---------- path B: one batch row per block, F split with accumulator -------- #

def _fsplit_compute(x_ref, w_ref, b_ref, mask_ref, out_ref, acc_ref, *, f_total):
    # x (1,S,TF), w (1,TF), b (1,S), mask (1,1,S), out (1,1,S), acc (1,S) f32
    f = pl.program_id(1)

    @pl.when(f == 0)
    def _():
        acc_ref[...] = jnp.zeros_like(acc_ref)

    x = x_ref[...].astype(jnp.float32)                        # (1, S, TF)
    w = w_ref[...].astype(jnp.float32)                        # (1, TF)
    prod = x * w[:, None, :]                                  # (1, S, TF)
    tf = x.shape[-1]
    if f_total % tf:                                          # ragged last F chunk
        col = jax.lax.broadcasted_iota(jnp.int32, prod.shape, 2) + f * tf
        prod = jnp.where(col < f_total, prod, 0.0)
    acc_ref[...] += jnp.sum(prod, axis=-1)                    # (1, S)

    @pl.when(f == pl.num_programs(1) - 1)
    def _():
        eij = acc_ref[...] + b_ref[...].astype(jnp.float32)   # (1, S)
        a = jnp.exp(jnp.tanh(eij))
        if mask_ref is not None:
            a = a * mask_ref[0].astype(jnp.float32)
        out_ref[0] = _normalize(a, out_ref.dtype)


def _fsplit_kernel_mask(x_ref, w_ref, b_ref, mask_ref, out_ref, acc_ref, *, f_total):
    _fsplit_compute(x_ref, w_ref, b_ref, mask_ref, out_ref, acc_ref, f_total=f_total)


def _fsplit_kernel_nomask(x_ref, w_ref, b_ref, out_ref, acc_ref, *, f_total):
    _fsplit_compute(x_ref, w_ref, b_ref, None, out_ref, acc_ref, f_total=f_total)


# --------------------------------- sizing ------------------------------------ #

def _budgets():
    """(per-block byte budget, vmem_limit_bytes) by TPU generation."""
    try:
        vmem = getattr(pltpu.get_tpu_info(), "vmem_capacity_bytes", None)
    except Exception:
        vmem = None
    if vmem is None:
        vmem = 64 * 1024 * 1024                    # assume the smallest (v7x)
    if vmem >= 128 * 1024 * 1024:                  # v5e / v6e (128 MiB physical)
        return 20 * 1024 * 1024, 80 * 1024 * 1024
    return 10 * 1024 * 1024, 48 * 1024 * 1024      # v7x (64 MiB physical)


# --------------------------------- builder ------------------------------------ #

def _call_pallas(x, w2, b2, mask, block_budget_bytes):
    B, S, F = x.shape
    blk_budget, gen_vmem_limit = _budgets()
    if block_budget_bytes is not None:
        blk_budget = int(block_budget_bytes)
    # Size tiles by f32-equivalent elements (in-kernel cast/product temporaries
    # are f32 regardless of the streamed dtype).
    elem_budget = max(1, blk_budget // 4)
    has_mask = mask is not None
    out_dtype = jnp.float32

    row_elems = S * F

    if elem_budget // row_elems >= 1:
        # ---- path A: grid over batch only, full (S, F) per block ---- #
        max_rows = elem_budget // row_elems
        cap = min(B, max_rows)
        if B >= 4 and B * row_elems * 4 > (4 << 20):
            cap = min(cap, max(1, B // 4))         # keep >= 4 grid steps (v7x megacore)
        tb = cap
        while B % tb:                               # largest divisor of B <= cap (no pad)
            tb -= 1
        g = B // tb

        x4 = x.reshape(g, tb, S, F)                 # free, contiguous reshape
        in_specs = [
            pl.BlockSpec((1, tb, S, F), lambda i: (i, 0, 0, 0)),
            pl.BlockSpec((1, F), lambda i: (0, 0)),
            pl.BlockSpec((1, S), lambda i: (0, 0)),
        ]
        args = [x4, w2, b2]
        if has_mask:
            in_specs.append(pl.BlockSpec((1, tb, S), lambda i: (i, 0, 0)))
            args.append(mask.reshape(g, tb, S))

        blk_f32 = tb * S * F * 4
        out = pl.pallas_call(
            _batch_kernel_mask if has_mask else _batch_kernel_nomask,
            out_shape=jax.ShapeDtypeStruct((g, tb, S), out_dtype),
            grid=(g,),
            in_specs=in_specs,
            out_specs=pl.BlockSpec((1, tb, S), lambda i: (i, 0, 0)),
            compiler_params=pltpu.CompilerParams(
                dimension_semantics=("parallel",),
                vmem_limit_bytes=max(gen_vmem_limit, 4 * blk_f32 + (4 << 20)),
            ),
        )(*args)
        return out.reshape(B, S)

    # ---- path B: one batch row per block, F split with an f32 accumulator ---- #
    if F > 128:
        k = max(1, elem_budget // (S * 128))
        tf = min(F, k * 128)                        # multiple of 128 (< F here)
    else:
        tf = F
    nf = pl.cdiv(F, tf)

    in_specs = [
        pl.BlockSpec((1, S, tf), lambda i, f: (i, 0, f)),
        pl.BlockSpec((1, tf), lambda i, f: (0, f)),
        pl.BlockSpec((1, S), lambda i, f: (0, 0)),
    ]
    args = [x, w2, b2]
    if has_mask:
        in_specs.append(pl.BlockSpec((1, 1, S), lambda i, f: (i, 0, 0)))
        args.append(mask.reshape(B, 1, S))

    kernel = functools.partial(
        _fsplit_kernel_mask if has_mask else _fsplit_kernel_nomask, f_total=F)
    blk_f32 = S * tf * 4
    out = pl.pallas_call(
        kernel,
        out_shape=jax.ShapeDtypeStruct((B, 1, S), out_dtype),
        grid=(B, nf),                                # reduction (F) axis last
        in_specs=in_specs,
        out_specs=pl.BlockSpec((1, 1, S), lambda i, f: (i, 0, 0)),
        scratch_shapes=[pltpu.VMEM((1, S), jnp.float32)],
        compiler_params=pltpu.CompilerParams(
            dimension_semantics=("parallel", "arbitrary"),
            vmem_limit_bytes=max(gen_vmem_limit, 4 * blk_f32 + (4 << 20)),
        ),
    )(*args)
    return out.reshape(B, S)


@functools.partial(jax.jit, static_argnames=("block_budget_bytes",))
def _impl_mask(x, w2, b2, mask, *, block_budget_bytes=None):
    return _call_pallas(x, w2, b2, mask, block_budget_bytes)


@functools.partial(jax.jit, static_argnames=("block_budget_bytes",))
def _impl_nomask(x, w2, b2, *, block_budget_bytes=None):
    return _call_pallas(x, w2, b2, None, block_budget_bytes)


def attention_weights(x, W, b=None, mask=None, *, block_budget_bytes=None):
    """Forward of AttentionWeights: x (B,S,F), W (F,), b (S,) or None, mask (B,S) or None."""
    B, S, F = x.shape
    # Only the tiny parameters are cast here; x / mask keep their native dtype.
    w2 = jnp.asarray(W, jnp.float32).reshape(1, F)
    b2 = (jnp.zeros((1, S), jnp.float32) if b is None
          else jnp.asarray(b, jnp.float32).reshape(1, S))
    if mask is None:
        return _impl_nomask(x, w2, b2, block_budget_bytes=block_budget_bytes)
    return _impl_mask(x, w2, b2, mask, block_budget_bytes=block_budget_bytes)


# -------------------------------- reference ----------------------------------- #

def _reference(x, W, b, mask=None):
    xf = x.astype(jnp.float32)
    eij = jnp.sum(xf * W.astype(jnp.float32)[None, None, :], axis=-1)
    if b is not None:
        eij = eij + b[None, :]
    a = jnp.exp(jnp.tanh(eij))
    if mask is not None:
        a = a * mask.astype(jnp.float32)
    return a / (jnp.sum(a, axis=1, keepdims=True) + 1e-7)


if __name__ == "__main__":
    key = jax.random.PRNGKey(0)
    kx, kw, km, kx2, kw2, km2, kx3, km3 = jax.random.split(key, 8)

    # shapes implied by the module: (batch, step_dim, features_dim)
    B, S, F = 2, 8, 32
    x = jax.random.normal(kx, (B, S, F), jnp.float32)
    bound = (6.0 / (F + 1)) ** 0.5                 # xavier_uniform of W.unsqueeze(0)
    W = jax.random.uniform(kw, (F,), jnp.float32, minval=-bound, maxval=bound)
    b = jnp.zeros((S,), jnp.float32)               # PyTorch init: zeros
    mask = (jax.random.uniform(km, (B, S)) > 0.2).astype(jnp.float32)

    # masked path
    out_m = jax.block_until_ready(attention_weights(x, W, b, mask))
    assert out_m.shape == (B, S)
    assert jnp.allclose(out_m, _reference(x, W, b, mask), atol=1e-5, rtol=1e-4)

    # no-mask path (separate kernel variant; no mask HBM stream, no dummy zeros)
    out_n = jax.block_until_ready(attention_weights(x, W, b, None))
    assert jnp.allclose(out_n, _reference(x, W, b, None), atol=1e-5, rtol=1e-4)

    # bf16 x streamed in native dtype (cast per-block inside the kernel)
    xb = x.astype(jnp.bfloat16)
    out_b = jax.block_until_ready(attention_weights(xb, W, b, mask))
    assert jnp.allclose(out_b, _reference(xb, W, b, mask), atol=1e-4, rtol=1e-3)

    # exercise the multi-block batch path (TB < B, divisor tiling, 4D-reshaped blocks)
    B3 = 16
    x3 = jax.random.normal(kx3, (B3, S, F), jnp.float32)
    m3 = (jax.random.uniform(km3, (B3, S)) > 0.2).astype(jnp.float32)
    out3 = jax.block_until_ready(
        attention_weights(x3, W, b, m3, block_budget_bytes=4096))
    assert jnp.allclose(out3, _reference(x3, W, b, m3), atol=1e-5, rtol=1e-4)

    # exercise the F-split fallback (oversized row): accumulator grid + ragged F mask
    B2, S2, F2 = 4, 16, 200
    x2 = jax.random.normal(kx2, (B2, S2, F2), jnp.float32)
    bound2 = (6.0 / (F2 + 1)) ** 0.5
    W2 = jax.random.uniform(kw2, (F2,), jnp.float32, minval=-bound2, maxval=bound2)
    b2v = jnp.zeros((S2,), jnp.float32)
    m2 = (jax.random.uniform(km2, (B2, S2)) > 0.2).astype(jnp.float32)
    out2 = jax.block_until_ready(
        attention_weights(x2, W2, b2v, m2, block_budget_bytes=16 * 128 * 4))
    assert jnp.allclose(out2, _reference(x2, W2, b2v, m2), atol=1e-5, rtol=1e-4)

    print("KERNEL_OK")
</pallas_src>

<mosaic_0001>
module attributes {stable_mosaic.version = 11 : i64} {
  func.func @_batch_kernel_mask(%arg0: i32, %arg1: memref<1x2x8x32xf32, #tpu.memory_space<vmem>>, %arg2: memref<1x32xf32, #tpu.memory_space<vmem>>, %arg3: memref<1x8xf32, #tpu.memory_space<vmem>>, %arg4: memref<1x2x8xf32, #tpu.memory_space<vmem>>, %arg5: memref<1x2x8xf32, #tpu.memory_space<vmem>>) attributes {dimension_semantics = [#tpu.dimension_semantics<parallel>], iteration_bounds = array<i64: 1>, scalar_prefetch = 0 : i64, scratch_operands = 0 : i64, tpu.core_type = #tpu.core_type<tc>, window_params = [{transform_indices = @transform_0, window_bounds = array<i64: 1, 2, 8, 32>}, {pipeline_mode = #tpu.pipeline_mode<synchronous>, transform_indices = @transform_1, window_bounds = array<i64: 1, 32>}, {pipeline_mode = #tpu.pipeline_mode<synchronous>, transform_indices = @transform_2, window_bounds = array<i64: 1, 8>}, {transform_indices = @transform_3, window_bounds = array<i64: 1, 2, 8>}, {transform_indices = @transform_4, window_bounds = array<i64: 1, 2, 8>}]} {
    %c0 = arith.constant 0 : index
    %c0_0 = arith.constant 0 : index
    %c0_1 = arith.constant 0 : index
    %c0_2 = arith.constant 0 : index
    %0 = vector.load %arg1[%c0, %c0_0, %c0_1, %c0_2] : memref<1x2x8x32xf32, #tpu.memory_space<vmem>>, vector<1x2x8x32xf32>
    %1 = vector.shape_cast %0 : vector<1x2x8x32xf32> to vector<2x8x32xf32>
    %c0_3 = arith.constant 0 : index
    %c0_4 = arith.constant 0 : index
    %2 = vector.load %arg2[%c0_3, %c0_4] : memref<1x32xf32, #tpu.memory_space<vmem>>, vector<1x32xf32>
    %c0_5 = arith.constant 0 : index
    %c0_6 = arith.constant 0 : index
    %3 = vector.load %arg3[%c0_5, %c0_6] : memref<1x8xf32, #tpu.memory_space<vmem>>, vector<1x8xf32>
    %4 = vector.shape_cast %2 : vector<1x32xf32> to vector<1x1x32xf32>
    %5 = vector.broadcast %4 : vector<1x1x32xf32> to vector<2x8x32xf32>
    %6 = arith.mulf %1, %5 : vector<2x8x32xf32>
    %cst = arith.constant dense<0.000000e+00> : vector<2x8xf32>
    %7 = vector.multi_reduction <add>, %6, %cst [2] : vector<2x8x32xf32> to vector<2x8xf32>
    %8 = vector.broadcast %3 : vector<1x8xf32> to vector<2x8xf32>
    %9 = arith.addf %7, %8 : vector<2x8xf32>
    %10 = math.tanh %9 : vector<2x8xf32>
    %11 = math.exp %10 : vector<2x8xf32>
    %c0_7 = arith.constant 0 : index
    %c0_8 = arith.constant 0 : index
    %c0_9 = arith.constant 0 : index
    %12 = vector.load %arg4[%c0_7, %c0_8, %c0_9] : memref<1x2x8xf32, #tpu.memory_space<vmem>>, vector<1x2x8xf32>
    %13 = vector.shape_cast %12 : vector<1x2x8xf32> to vector<2x8xf32>
    %14 = arith.mulf %11, %13 : vector<2x8xf32>
    %cst_10 = arith.constant dense<0.000000e+00> : vector<2xf32>
    %15 = vector.multi_reduction <add>, %14, %cst_10 [1] : vector<2x8xf32> to vector<2xf32>
    %16 = vector.shape_cast %15 : vector<2xf32> to vector<2x1xf32>
    %cst_11 = arith.constant 1.000000e-07 : f32
    %17 = vector.broadcast %cst_11 : f32 to vector<2x1xf32>
    %18 = arith.addf %16, %17 : vector<2x1xf32>
    %19 = tpu.reciprocal %18 {approx = true} : vector<2x1xf32> -> vector<2x1xf32>
    %20 = arith.mulf %18, %19 : vector<2x1xf32>
    %cst_12 = arith.constant 2.000000e+00 : f32
    %21 = vector.broadcast %cst_12 : f32 to vector<2x1xf32>
    %22 = arith.subf %21, %20 : vector<2x1xf32>
    %23 = arith.mulf %19, %22 : vector<2x1xf32>
    %24 = vector.broadcast %23 : vector<2x1xf32> to vector<2x8xf32>
    %25 = arith.mulf %14, %24 : vector<2x8xf32>
    %c0_13 = arith.constant 0 : index
    %c0_14 = arith.constant 0 : index
    %c0_15 = arith.constant 0 : index
    %26 = vector.load %arg5[%c0_13, %c0_14, %c0_15] : memref<1x2x8xf32, #tpu.memory_space<vmem>>, vector<1x2x8xf32>
    %27 = vector.shape_cast %26 : vector<1x2x8xf32> to vector<2x8xf32>
    %28 = vector.shape_cast %25 : vector<2x8xf32> to vector<1x2x8xf32>
    tpu.vector_store %arg5[%c0_13, %c0_14, %c0_15], %28 {strides = array<i32>} : memref<1x2x8xf32, #tpu.memory_space<vmem>>, vector<1x2x8xf32>,
    return
  }
  func.func @transform_0(%arg0: i32) -> (i32, i32, i32, i32) {
    %c0_i32 = arith.constant 0 : i32
    %c0_i32_0 = arith.constant 0 : i32
    %c0_i32_1 = arith.constant 0 : i32
    %c0_i32_2 = arith.constant 0 : i32
    return %arg0, %c0_i32, %c0_i32_0, %c0_i32_1 : i32, i32, i32, i32
  }
  func.func @transform_1(%arg0: i32) -> (i32, i32) {
    %c0_i32 = arith.constant 0 : i32
    %c0_i32_0 = arith.constant 0 : i32
    %c0_i32_1 = arith.constant 0 : i32
    return %c0_i32, %c0_i32_0 : i32, i32
  }
  func.func @transform_2(%arg0: i32) -> (i32, i32) {
    %c0_i32 = arith.constant 0 : i32
    %c0_i32_0 = arith.constant 0 : i32
    %c0_i32_1 = arith.constant 0 : i32
    return %c0_i32, %c0_i32_0 : i32, i32
  }
  func.func @transform_3(%arg0: i32) -> (i32, i32, i32) {
    %c0_i32 = arith.constant 0 : i32
    %c0_i32_0 = arith.constant 0 : i32
    %c0_i32_1 = arith.constant 0 : i32
    return %arg0, %c0_i32, %c0_i32_0 : i32, i32, i32
  }
  func.func @transform_4(%arg0: i32) -> (i32, i32, i32) {
    %c0_i32 = arith.constant 0 : i32
    %c0_i32_0 = arith.constant 0 : i32
    %c0_i32_1 = arith.constant 0 : i32
    return %arg0, %c0_i32, %c0_i32_0 : i32, i32, i32
  }
}

</mosaic_0001>

<llo_original>
// kernel: _impl_mask.1
$region0: #{_impl_mask.1}
  #allocation0 [shape = 'u32[]', space=smem, size = 0x4, offset = 0x4, fixed_abs, tag = 'smem constant byte address 0x4 - core index']
  #allocation1 [shape = 'u32[144,128]{1,0:T(1,128)}', space=vmem, size = 0x12000, scoped, tag = 'internal scratch']
  %s0 = inlined_call_operand.hbm [shape: f32[1,2,8,32], index: 0, kind: input, shape index: {}]
  %s1 = inlined_call_operand.vmem [shape: f32[1,32], index: 1, kind: input, shape index: {}]
  %s2 = inlined_call_operand.vmem [shape: f32[1,8], index: 2, kind: input, shape index: {}]
  %s3 = inlined_call_operand.vmem [shape: f32[1,2,8], index: 3, kind: input, shape index: {}]
  %s4 = inlined_call_operand.hbm [shape: f32[1,2,8], index: 4, kind: output, shape index: {}]
  %s5 = sld [smem:[#allocation0]]
  $region30: #{_impl_mask.1} parent=0
    _
  %s7 = ssub.s32 1, %s5
  %s8 = scalar_select 0, %s7, %s5
  $region1: #{_impl_mask.1} parent=0
    #allocation2 [shape = 'u8[8192]{0}', space=vmem, size = 0x2000, scoped, tag = 'input window, operand 0, single buffered']
    #allocation3 [shape = 's32[1]{0}', space=sflag, size = 0x4, scoped, tag = 'scoped memory for _impl_mask.1']
    #allocation4 [shape = 's32[1]{0}', space=sflag, size = 0x4, scoped, tag = 'scoped memory for _impl_mask.1']
    #allocation5 [shape = 'u8[1024]{0}', space=vmem, size = 0x400, scoped, tag = 'output window, operand 0, single buffered']
    %9 = vsyncpa [#allocation3], 0
    %10 = vsyncpa [#allocation4], 0
    // Predicated region
    $region2: #{_impl_mask.1} parent=1 // pred_check
      _
    $region3: #{_impl_mask.1} parent=1 // pred_check_branch
      %12 = sbr.rel (0) target = $region5
    $region4: #{_impl_mask.1} parent=1 // pred_region
      %s14 = ssub.s32 256, 256
      %15 = vsyncadd [#allocation3], %s14
      %s16 = sshll.u32 [#allocation2], 4
      %s17 = int_to_ptr.vmem [resolvable:$true] %s16
      %22 = dma.hbm_to_vmem [thread:$0]  %s0, 256, %s17, [#allocation3], 128, 128, 8
    $region5: #{_impl_mask.1} parent=1 // pred_fallthru
      _
    // Predicated region
    $region6: #{_impl_mask.1} parent=1 // pred_check
      _
    $region7: #{_impl_mask.1} parent=1 // pred_check_branch
      %24 = sbr.rel (0) target = $region9
    $region8: #{_impl_mask.1} parent=1 // pred_region
      _
    $region9: #{_impl_mask.1} parent=1 // pred_fallthru
      _
    // Predicated region
    $region10: #{_impl_mask.1} parent=1 // pred_check
      _
    $region11: #{_impl_mask.1} parent=1 // pred_check_branch
      %26 = sbr.rel (0) target = $region13
    $region12: #{_impl_mask.1} parent=1 // pred_region
      _
    $region13: #{_impl_mask.1} parent=1 // pred_fallthru
      _
    // Predicated region
    $region14: #{_impl_mask.1} parent=1 // pred_check
      _
    $region15: #{_impl_mask.1} parent=1 // pred_check_branch
      %28 = sbr.rel (0) target = $region17
    $region16: #{_impl_mask.1} parent=1 // pred_region
      _
    $region17: #{_impl_mask.1} parent=1 // pred_fallthru
      _
    // Predicated region
    $region18: #{_impl_mask.1} parent=1 // pred_check
      _
    $region19: #{_impl_mask.1} parent=1 // pred_check_branch
      %30 = sbr.rel (0) target = $region21
    $region20: #{_impl_mask.1} parent=1 // pred_region
      %31 = dma.done [#allocation3], 256
    $region21: #{_impl_mask.1} parent=1 // pred_fallthru
      _
    %v32 = vld [vmem:[#allocation2] sm:$0xff]
    %v33 = vld [vmem:[#allocation2 + $0x8] sm:$0xff]
    %v34 = vld [vmem:[%s1] sm:$0x1]
    %v35 = vld [vmem:[%s2] sm:$0x1]
    %v37 = vlaneseq
    %v38 = vshrl.u32 %v37, 7
    %v39 = vsub.s32 0, %v38
    %v40 = vrot.slane %v34, %v39
    %v42 = vmul.f32 %v32, %v40
    %v43 = vmul.f32 %v33, %v40
    %vm44 = vcmask 261120
    %v45 = vsel %vm44, %v42, 0.0
    %46 = vadd.xlane.f32.xlu0 %v45
    %v47 = vpop.xlane.xlu0 %46
    %v48 = vsel %vm44, %v43, 0.0
    %49 = vadd.xlane.f32.xlu0 %v48
    %v50 = vpop.xlane.xlu0 %49
    %v52 = vlaneseq
    %v53 = vshrl.u32 %v52, 7
    %v54 = vsub.s32 0, %v53
    %v55 = vrot.slane %v35, %v54
    %57 = vbcast.lane.b32.xlu0 %v55, 256
    %v58 = vpop.permute.xlu0 %57
    %v60 = vadd.f32 %v47, %v58
    %v61 = vadd.f32 %v50, %v58
    %v62 = vtanh.pop %v60
    %v63 = vtanh.pop %v61
    %v64 = vmul.f32 %v62, 1.442695
    %v65 = vpow.pop %v64
    %v66 = vmul.f32 %v63, 1.442695
    %v67 = vpow.pop %v66
    %v68 = vld [vmem:[%s3] sm:$0x3]
    %v70 = vlaneseq
    %v71 = vshrl.u32 %v70, 7
    %v72 = vsub.s32 0, %v71
    %v73 = vrot.slane %v68, %v72
    %75 = vbcast.lane.b32.xlu0 %v73, 256
    %v76 = vpop.permute.xlu0 %75
    %v77 = vlaneseq
    %v78 = vshrl.u32 %v77, 7
    %v79 = vsub.s32 1, %v78
    %v80 = vrot.slane %v68, %v79
    %82 = vbcast.lane.b32.xlu0 %v80, 256
    %v83 = vpop.permute.xlu0 %82
    %v86 = vmul.f32 %v65, %v76
    %v87 = vmul.f32 %v67, %v83
    %90 = vset.pattern.permute.xlu0 0
    %91 = vperm.xlu0 %90, %v86
    %v92 = vpop.permute.xlu0 %91
    %93 = vset.pattern.permute.xlu0 0
    %94 = vperm.xlu0 %93, %v87
    %v95 = vpop.permute.xlu0 %94
    %v96 = vlaneseq
    %v97 = vand.u32 %v96, 127
    %v98 = vlaneseq
    %v99 = vshrl.u32 %v98, 7
    %v100 = vsub.s32 %v97, %v99
    %v101 = vrot.slane %v92, %v100
    %v102 = vlaneseq
    %v103 = vshrl.u32 %v102, 7
    %v104 = vsub.s32 %v97, %v103
    %v105 = vrot.slane %v95, %v104
    %vm106 = vcmask 1041409
    %v107 = vsel %vm106, %v105, %v101
    %vm109 = vcmask 58368
    %v110 = vsel %vm109, %v107, 0.0
    %111 = vadd.xlane.f32.xlu0 %v110
    %v112 = vpop.xlane.xlu0 %111
    %v113 = vadd.f32 %v112, 1e-07
    %v114 = vrcp.pop %v113
    %v115 = vmul.f32 %v113, %v114
    %v116 = vsub.f32 2.0, %v115
    %v117 = vmul.f32 %v114, %v116
    %v119 = vlaneseq
    %v120 = vshrl.u32 %v119, 7
    %v121 = vsub.s32 0, %v120
    %v122 = vrot.slane %v117, %v121
    %v123 = vlaneseq
    %v124 = vshrl.u32 %v123, 7
    %v125 = vsub.s32 1, %v124
    %v126 = vrot.slane %v117, %v125
    %v129 = vmul.f32 %v86, %v122
    %v130 = vmul.f32 %v87, %v126
    %133 = vset.pattern.permute.xlu0 0
    %134 = vperm.xlu0 %133, %v129
    %v135 = vpop.permute.xlu0 %134
    %136 = vset.pattern.permute.xlu0 0
    %137 = vperm.xlu0 %136, %v130
    %v138 = vpop.permute.xlu0 %137
    %v139 = vlaneseq
    %v140 = vshrl.u32 %v139, 7
    %v141 = vsub.s32 %v97, %v140
    %v142 = vrot.slane %v135, %v141
    %v143 = vlaneseq
    %v144 = vshrl.u32 %v143, 7
    %v145 = vsub.s32 %v97, %v144
    %v146 = vrot.slane %v138, %v145
    %v147 = vsel %vm106, %v146, %v142
    %149 = vst.msk [vmem:[#allocation5] sm:$0x3] %vm109, %v147
    // Predicated region
    $region22: #{_impl_mask.1} parent=1 // pred_check
      _
    $region23: #{_impl_mask.1} parent=1 // pred_check_branch
      %151 = sbr.rel (0) target = $region25
    $region24: #{_impl_mask.1} parent=1 // pred_region
      %s153 = ssub.s32 32, 32
      %154 = vsyncadd [#allocation4], %s153
      %s156 = sshll.u32 [#allocation5], 4
      %s157 = int_to_ptr.vmem [resolvable:$true] %s156
      %159 = dma.vmem_to_hbm [thread:$0]  %s157, 32, %s4, [#allocation4]
    $region25: #{_impl_mask.1} parent=1 // pred_fallthru
      _
    // Predicated region
    $region26: #{_impl_mask.1} parent=1 // pred_check
      _
    $region27: #{_impl_mask.1} parent=1 // pred_check_branch
      %161 = sbr.rel (0) target = $region29
    $region28: #{_impl_mask.1} parent=1 // pred_region
      %162 = dma.done [#allocation4], 32
    $region29: #{_impl_mask.1} parent=1 // pred_fallthru
      _
    %163 = vsyncpa [#allocation3], 1
    %164 = vsyncpa [#allocation4], 1

</llo_original>
